<compile_context>
chip_gen: v6e
topology: v6e:2x2x1
jax: 0.10.0
libtpu: 0.0.40
codegen_flags: <defaults>
</compile_context>

<pallas_src>
import functools

import jax
import jax.numpy as jnp
from jax.experimental import pallas as pl
from jax.experimental.pallas import tpu as pltpu


def _round_up(x, m):
    return ((x + m - 1) // m) * m


def _embed_kernel(seed_ref, ids_ref, w_hi_ref, w_lo_ref, pos_ref, out_ref,
                  *, drop_out, training):
    """One token tile: MXU one-hot gather (bf16 hi/lo planes) + VPU positional add (+dropout).

    seed_ref: (1,) int32 in SMEM (scalar prefetch) — dropout seed, read only when training.
    ids_ref:  (T, 1) int32 — token ids for this tile.
    w_hi_ref: (V, D) bf16  — resident hi plane of the token table.
    w_lo_ref: (V, D) bf16  — resident lo plane (f32 residual) of the token table.
    pos_ref:  (T, D) f32   — resident lane-packed positional slab (positions cycle per tile).
    out_ref:  (T, D) f32   — token-row output tile.
    """
    ids = ids_ref[...]                                        # (T, 1) int32
    t = ids.shape[0]
    v = w_hi_ref.shape[0]

    # One boolean compare + one cast -> the one-hot LHS (token id only; positions are a
    # VPU add below, so they add neither K-depth nor compares).
    lane = jax.lax.broadcasted_iota(jnp.int32, (t, v), 1)
    onehot = (lane == ids).astype(jnp.bfloat16)               # (T, V)

    # Two bf16 MXU passes reconstruct the f32 table rows exactly to ~2^-17 relative error.
    x = jnp.dot(onehot, w_hi_ref[...], preferred_element_type=jnp.float32)
    x = x + jnp.dot(onehot, w_lo_ref[...], preferred_element_type=jnp.float32)

    # Positional embedding: plain VALU add against the resident slab.
    x = x + pos_ref[...]

    if training and drop_out > 0.0:
        # Inverted dropout with the on-chip PRNG (only traced when training=True).
        pltpu.prng_seed(seed_ref[0] + pl.program_id(0))
        bits = pltpu.bitcast(pltpu.prng_random_bits(x.shape), jnp.uint32)
        thresh = jnp.uint32(min(int(drop_out * (2.0 ** 32)), 2 ** 32 - 1))
        keep = bits >= thresh
        x = jnp.where(keep, x * (1.0 / (1.0 - drop_out)), 0.0)
        # TODO(synk): PyTorch's dropout uses a different RNG stream; training-mode outputs
        #             match only in distribution, not elementwise.

    out_ref[...] = x.astype(out_ref.dtype)


def prepare_token_table(tok_table):
    """Hoisted parameter preprocessing (run ONCE, not per forward call):
    split the f32 token table into bf16 hi/lo planes for the exact 2-pass MXU gather."""
    hi = tok_table.astype(jnp.bfloat16)
    lo = (tok_table - hi.astype(jnp.float32)).astype(jnp.bfloat16)
    return hi, lo


def transformer_embedding(ids, tok_hi, tok_lo, pos_table_full, drop_out=0.0,
                          *, training=False, seed=0, row_tile=1024):
    """Forward of TransformerEmbedding: tok_table[ids] + pos_table[:S], then dropout.

    ids:            [B, S] int32 token ids
    tok_hi/tok_lo:  [V, D] bf16 hi/lo planes from prepare_token_table(tok_table)
    pos_table_full: [max_len, D] f32 sinusoidal positional table, max_len >= S
    returns:        [B, S, D] f32
    """
    B, S = ids.shape
    V, D = tok_hi.shape
    assert pos_table_full.shape[0] >= S and pos_table_full.shape[1] == D

    # --- token-tile geometry: tile is a multiple of S_pad so positions cycle per tile ----
    S_pad = _round_up(S, 8)
    if B * S_pad <= row_tile:
        t_tile = B * S_pad
    else:
        t_tile = S_pad * max(1, row_tile // S_pad)
    n_total = _round_up(B * S_pad, t_tile)
    n_tiles = n_total // t_tile

    # --- per-call glue (cheap, O(tokens)) --------------------------------------------
    ids_p = jnp.pad(ids.astype(jnp.int32), ((0, 0), (0, S_pad - S)))
    ids_flat = jnp.pad(ids_p.reshape(B * S_pad), (0, n_total - B * S_pad))
    ids_col = ids_flat.reshape(n_total, 1)

    pos_rows = jnp.pad(pos_table_full[:S].astype(jnp.float32),
                       ((0, S_pad - S), (0, 0)))              # (S_pad, D)
    pos_slab = jnp.tile(pos_rows, (t_tile // S_pad, 1))       # (t_tile, D), VMEM-resident

    seed_arr = jnp.asarray([seed], dtype=jnp.int32)

    # --- VMEM budget from actual needs (not a fixed 32 MiB) ---------------------------
    resident = 2 * V * D * 2 + t_tile * D * 4                 # hi + lo bf16 planes + pos slab
    per_tile = t_tile * 4 + t_tile * D * 4                    # ids tile + out tile
    vmem_need = 2 * (resident + per_tile) + (1 << 20)         # conservative: all double-buffered
    vmem_limit = int(min(max(vmem_need, 4 << 20), 100 << 20))
    # NOTE: on v7x (64 MiB VMEM/TC) the resident planes could additionally be single-buffered
    # via pipeline_mode=pl.Buffered(1); not needed at these sizes.

    kernel = functools.partial(_embed_kernel, drop_out=float(drop_out),
                               training=bool(training))

    out_flat = pl.pallas_call(
        kernel,
        out_shape=jax.ShapeDtypeStruct((n_total, D), jnp.float32),
        grid_spec=pltpu.PrefetchScalarGridSpec(
            num_scalar_prefetch=1,
            grid=(n_tiles,),
            in_specs=[
                pl.BlockSpec((t_tile, 1), lambda i, seed: (i, 0)),   # token ids (per tile)
                pl.BlockSpec((V, D), lambda i, seed: (0, 0)),        # resident hi plane
                pl.BlockSpec((V, D), lambda i, seed: (0, 0)),        # resident lo plane
                pl.BlockSpec((t_tile, D), lambda i, seed: (0, 0)),   # resident pos slab
            ],
            out_specs=pl.BlockSpec((t_tile, D), lambda i, seed: (i, 0)),
        ),
        compiler_params=pltpu.CompilerParams(
            dimension_semantics=("parallel",),                       # shard tiles across TCs
            vmem_limit_bytes=vmem_limit,
        ),
    )(seed_arr, ids_col, tok_hi, tok_lo, pos_slab)

    # (n_total, D) -> (B, S, D): leading-dim split + slice only — no minor-dim relayout.
    out = out_flat.reshape(n_total // S_pad, S_pad, D)[:B, :S]
    return out


def make_sinusoidal_pe(max_len, dim_vector):
    pos = jnp.arange(max_len, dtype=jnp.float32)[:, None]             # [max_len, 1]
    i2 = jnp.arange(0, dim_vector, 2, dtype=jnp.float32)              # [D/2]
    div = jnp.exp(-(jnp.log(10000.0) / dim_vector) * i2)              # 10000^(-2i/D)
    pe = jnp.zeros((max_len, dim_vector), dtype=jnp.float32)
    pe = pe.at[:, 0::2].set(jnp.sin(pos * div))
    pe = pe.at[:, 1::2].set(jnp.cos(pos * div))
    return pe


if __name__ == "__main__":
    # module hyper-parameters
    vocab_size = 32
    dim_vector = 32
    max_len = 16
    drop_out = 0.1   # dropout prob (demo runs eval mode -> identity, matching PyTorch .eval())

    # example input: [batch_size, seq_length] token ids
    batch_size, seq_len = 2, 8
    key = jax.random.PRNGKey(0)
    k_ids, k_emb = jax.random.split(key)
    ids = jax.random.randint(k_ids, (batch_size, seq_len), 0, vocab_size, dtype=jnp.int32)

    # deterministic parameter init: nn.Embedding default is N(0, 1)
    tok_table = jax.random.normal(k_emb, (vocab_size, dim_vector), dtype=jnp.float32)
    pos_table = make_sinusoidal_pe(max_len, dim_vector)

    # hoisted preprocessing: bf16 hi/lo split, done once
    tok_hi, tok_lo = prepare_token_table(tok_table)

    out = transformer_embedding(ids, tok_hi, tok_lo, pos_table, drop_out, training=False)
    out = jax.block_until_ready(out)

    # pure-JAX reference check
    ref = tok_table[ids] + pos_table[:seq_len][None, :, :]
    assert out.shape == (batch_size, seq_len, dim_vector)
    max_err = float(jnp.max(jnp.abs(out - ref)))
    assert jnp.allclose(out, ref, atol=1e-3, rtol=1e-3), max_err

    print("KERNEL_OK")
</pallas_src>

<mosaic_0001>
module attributes {stable_mosaic.version = 11 : i64} {
  func.func @_embed_kernel(%arg0: i32, %arg1: memref<1xi32, #tpu.memory_space<smem>>, %arg2: memref<16x1xi32, #tpu.memory_space<vmem>>, %arg3: memref<32x32xbf16, #tpu.memory_space<vmem>>, %arg4: memref<32x32xbf16, #tpu.memory_space<vmem>>, %arg5: memref<16x32xf32, #tpu.memory_space<vmem>>, %arg6: memref<16x32xf32, #tpu.memory_space<vmem>>) attributes {dimension_semantics = [#tpu.dimension_semantics<parallel>], iteration_bounds = array<i64: 1>, scalar_prefetch = 1 : i64, scratch_operands = 0 : i64, tpu.core_type = #tpu.core_type<tc>, window_params = [{transform_indices = @transform_0, window_bounds = array<i64: 16, 1>}, {pipeline_mode = #tpu.pipeline_mode<synchronous>, transform_indices = @transform_1, window_bounds = array<i64: 32, 32>}, {pipeline_mode = #tpu.pipeline_mode<synchronous>, transform_indices = @transform_2, window_bounds = array<i64: 32, 32>}, {pipeline_mode = #tpu.pipeline_mode<synchronous>, transform_indices = @transform_3, window_bounds = array<i64: 16, 32>}, {transform_indices = @transform_4, window_bounds = array<i64: 16, 32>}]} {
    %c0 = arith.constant 0 : index
    %c0_0 = arith.constant 0 : index
    %0 = vector.load %arg2[%c0, %c0_0] : memref<16x1xi32, #tpu.memory_space<vmem>>, vector<16x1xi32>
    %1 = tpu.iota {dimensions = array<i32: 1>} : vector<16x32xi32>
    %2 = vector.broadcast %0 : vector<16x1xi32> to vector<16x32xi32>
    %3 = arith.cmpi eq, %1, %2 : vector<16x32xi32>
    %4 = arith.extui %3 : vector<16x32xi1> to vector<16x32xi32>
    %5 = arith.sitofp %4 : vector<16x32xi32> to vector<16x32xf32>
    %6 = arith.truncf %5 : vector<16x32xf32> to vector<16x32xbf16>
    %c0_1 = arith.constant 0 : index
    %c0_2 = arith.constant 0 : index
    %7 = vector.load %arg3[%c0_1, %c0_2] : memref<32x32xbf16, #tpu.memory_space<vmem>>, vector<32x32xbf16>
    %cst = arith.constant dense<0.000000e+00> : vector<16x32xf32>
    %8 = tpu.matmul %6, %7, %cst {dimension_numbers = #tpu.dot_dimension_numbers<[1], [0], [0], [1], [0, 0, 1, 1], [], []>} : vector<16x32xbf16>, vector<32x32xbf16>, vector<16x32xf32> -> vector<16x32xf32>
    %c0_3 = arith.constant 0 : index
    %c0_4 = arith.constant 0 : index
    %9 = vector.load %arg4[%c0_3, %c0_4] : memref<32x32xbf16, #tpu.memory_space<vmem>>, vector<32x32xbf16>
    %cst_5 = arith.constant dense<0.000000e+00> : vector<16x32xf32>
    %10 = tpu.matmul %6, %9, %cst_5 {dimension_numbers = #tpu.dot_dimension_numbers<[1], [0], [0], [1], [0, 0, 1, 1], [], []>} : vector<16x32xbf16>, vector<32x32xbf16>, vector<16x32xf32> -> vector<16x32xf32>
    %11 = arith.addf %8, %10 : vector<16x32xf32>
    %c0_6 = arith.constant 0 : index
    %c0_7 = arith.constant 0 : index
    %12 = vector.load %arg5[%c0_6, %c0_7] : memref<16x32xf32, #tpu.memory_space<vmem>>, vector<16x32xf32>
    %13 = arith.addf %11, %12 : vector<16x32xf32>
    %c0_8 = arith.constant 0 : index
    %c0_9 = arith.constant 0 : index
    %14 = vector.load %arg6[%c0_8, %c0_9] : memref<16x32xf32, #tpu.memory_space<vmem>>, vector<16x32xf32>
    tpu.vector_store %arg6[%c0_8, %c0_9], %13 {strides = array<i32>} : memref<16x32xf32, #tpu.memory_space<vmem>>, vector<16x32xf32>,
    return
  }
  func.func @transform_0(%arg0: i32, %arg1: memref<1xi32, #tpu.memory_space<smem>>) -> (i32, i32) {
    %c0_i32 = arith.constant 0 : i32
    %c0_i32_0 = arith.constant 0 : i32
    return %arg0, %c0_i32 : i32, i32
  }
  func.func @transform_1(%arg0: i32, %arg1: memref<1xi32, #tpu.memory_space<smem>>) -> (i32, i32) {
    %c0_i32 = arith.constant 0 : i32
    %c0_i32_0 = arith.constant 0 : i32
    %c0_i32_1 = arith.constant 0 : i32
    return %c0_i32, %c0_i32_0 : i32, i32
  }
  func.func @transform_2(%arg0: i32, %arg1: memref<1xi32, #tpu.memory_space<smem>>) -> (i32, i32) {
    %c0_i32 = arith.constant 0 : i32
    %c0_i32_0 = arith.constant 0 : i32
    %c0_i32_1 = arith.constant 0 : i32
    return %c0_i32, %c0_i32_0 : i32, i32
  }
  func.func @transform_3(%arg0: i32, %arg1: memref<1xi32, #tpu.memory_space<smem>>) -> (i32, i32) {
    %c0_i32 = arith.constant 0 : i32
    %c0_i32_0 = arith.constant 0 : i32
    %c0_i32_1 = arith.constant 0 : i32
    return %c0_i32, %c0_i32_0 : i32, i32
  }
  func.func @transform_4(%arg0: i32, %arg1: memref<1xi32, #tpu.memory_space<smem>>) -> (i32, i32) {
    %c0_i32 = arith.constant 0 : i32
    %c0_i32_0 = arith.constant 0 : i32
    return %arg0, %c0_i32 : i32, i32
  }
}

</mosaic_0001>

<llo_original>
// kernel: tpu_custom_call.1
$region0: #{tpu_custom_call.1}
  #allocation0 [shape = 'u32[]', space=smem, size = 0x4, offset = 0x4, fixed_abs, tag = 'smem constant byte address 0x4 - core index']
  #allocation1 [shape = 'u32[144,128]{1,0:T(1,128)}', space=vmem, size = 0x12000, scoped, tag = 'internal scratch']
  #allocation2 [shape = 's32[1]{0}', space=sflag, size = 0x4, scoped, tag = 'scoped memory for tpu_custom_call.1']
  #allocation3 [shape = 's32[1]{0:T(128)S(6)}', space=smem, size = 0x200, scoped, tag = 'prefetched SMEM operand 0']
  %s0 = inlined_call_operand.<no memory space> [shape: s32[1], index: 0, kind: input, shape index: {}]
  %s1 = inlined_call_operand.vmem [shape: s32[16,1], index: 1, kind: input, shape index: {}]
  %s2 = inlined_call_operand.vmem [shape: bf16[32,32], index: 2, kind: input, shape index: {}]
  %s3 = inlined_call_operand.hbm [shape: bf16[32,32], index: 3, kind: input, shape index: {}]
  %s4 = inlined_call_operand.hbm [shape: f32[16,32], index: 4, kind: input, shape index: {}]
  %s5 = inlined_call_operand.hbm [shape: f32[16,32], index: 5, kind: output, shape index: {}]
  %s6 = sld [smem:[#allocation0]]
  $region34: #{tpu_custom_call.1} parent=0
    _
  %s8 = ssub.s32 1, %s6
  %s9 = scalar_select 0, %s8, %s6
  %10 = sst [smem:[#allocation3]] %s0
  $region1: #{tpu_custom_call.1} parent=0
    #allocation4 [shape = 'u8[8192]{0}', space=vmem, size = 0x2000, scoped, tag = 'input window, operand 3, single buffered']
    #allocation5 [shape = 's32[1]{0}', space=sflag, size = 0x4, scoped, tag = 'scoped memory for tpu_custom_call.1']
    #allocation6 [shape = 's32[1]{0}', space=sflag, size = 0x4, scoped, tag = 'scoped memory for tpu_custom_call.1']
    #allocation7 [shape = 'u8[8192]{0}', space=vmem, size = 0x2000, scoped, tag = 'input window, operand 4, single buffered']
    #allocation8 [shape = 's32[1]{0}', space=sflag, size = 0x4, scoped, tag = 'scoped memory for tpu_custom_call.1']
    #allocation9 [shape = 'u8[8192]{0}', space=vmem, size = 0x2000, scoped, tag = 'output window, operand 0, single buffered']
    %11 = vsyncpa [#allocation5], 0
    %12 = vsyncpa [#allocation8], 0
    %13 = vsyncpa [#allocation6], 0
    // Predicated region
    $region2: #{tpu_custom_call.1} parent=1 // pred_check
      _
    $region3: #{tpu_custom_call.1} parent=1 // pred_check_branch
      %15 = sbr.rel (0) target = $region5
    $region4: #{tpu_custom_call.1} parent=1 // pred_region
      _
    $region5: #{tpu_custom_call.1} parent=1 // pred_fallthru
      _
    // Predicated region
    $region6: #{tpu_custom_call.1} parent=1 // pred_check
      _
    $region7: #{tpu_custom_call.1} parent=1 // pred_check_branch
      %17 = sbr.rel (0) target = $region9
    $region8: #{tpu_custom_call.1} parent=1 // pred_region
      _
    $region9: #{tpu_custom_call.1} parent=1 // pred_fallthru
      _
    // Predicated region
    $region10: #{tpu_custom_call.1} parent=1 // pred_check
      _
    $region11: #{tpu_custom_call.1} parent=1 // pred_check_branch
      %19 = sbr.rel (0) target = $region13
    $region12: #{tpu_custom_call.1} parent=1 // pred_region
      %s21 = ssub.s32 256, 256
      %22 = vsyncadd [#allocation5], %s21
      %s23 = sshll.u32 [#allocation4], 4
      %s24 = int_to_ptr.vmem [resolvable:$true] %s23
      %29 = dma.hbm_to_vmem [thread:$0]  %s3, 256, %s24, [#allocation5], 64, 64, 4
    $region13: #{tpu_custom_call.1} parent=1 // pred_fallthru
      _
    // Predicated region
    $region14: #{tpu_custom_call.1} parent=1 // pred_check
      _
    $region15: #{tpu_custom_call.1} parent=1 // pred_check_branch
      %31 = sbr.rel (0) target = $region17
    $region16: #{tpu_custom_call.1} parent=1 // pred_region
      %s33 = ssub.s32 256, 256
      %34 = vsyncadd [#allocation8], %s33
      %s35 = sshll.u32 [#allocation7], 4
      %s36 = int_to_ptr.vmem [resolvable:$true] %s35
      %41 = dma.hbm_to_vmem [thread:$0]  %s4, 256, %s36, [#allocation8], 128, 128, 8
    $region17: #{tpu_custom_call.1} parent=1 // pred_fallthru
      _
    // Predicated region
    $region18: #{tpu_custom_call.1} parent=1 // pred_check
      _
    $region19: #{tpu_custom_call.1} parent=1 // pred_check_branch
      %43 = sbr.rel (0) target = $region21
    $region20: #{tpu_custom_call.1} parent=1 // pred_region
      %44 = dma.done [#allocation5], 256
    $region21: #{tpu_custom_call.1} parent=1 // pred_fallthru
      _
    // Predicated region
    $region22: #{tpu_custom_call.1} parent=1 // pred_check
      _
    $region23: #{tpu_custom_call.1} parent=1 // pred_check_branch
      %46 = sbr.rel (0) target = $region25
    $region24: #{tpu_custom_call.1} parent=1 // pred_region
      %47 = dma.done [#allocation8], 256
    $region25: #{tpu_custom_call.1} parent=1 // pred_fallthru
      _
    %v49 = vld [vmem:[%s1] sm:$0xff]
    %v50 = vld [vmem:[%s1 + $0x8] sm:$0xff]
    %v51 = vlaneseq
    %v52 = vand.u32 %v51, 127
    %53 = vset.pattern.permute.xlu0 0
    %54 = vperm.xlu0 %53, %v49
    %v55 = vpop.permute.xlu0 %54
    %56 = vset.pattern.permute.xlu0 0
    %57 = vperm.xlu0 %56, %v50
    %v58 = vpop.permute.xlu0 %57
    %vm59 = vcmp.eq.s32.totalorder %v52, %v55
    %vm60 = vcmp.eq.s32.totalorder %v52, %v58
    %v61 = vsel %vm59, 1, 0
    %v62 = vsel %vm60, 1, 0
    %v63 = vcvt.s32.f32 %v61
    %v64 = vcvt.s32.f32 %v62
    %v65 = vpack.c.bf16 %v64, %v63
    %v66 = vld [vmem:[%s2] sm:$0xf]
    %v67 = vld [vmem:[%s2 + $0x4] sm:$0xf]
    %v68 = vld [vmem:[%s2 + $0x8] sm:$0xf]
    %v69 = vld [vmem:[%s2 + $0xc] sm:$0xf]
    %v70 = vld [vmem:[#allocation4] sm:$0xf]
    %v71 = vld [vmem:[#allocation4 + $0x4] sm:$0xf]
    %v72 = vld [vmem:[#allocation4 + $0x8] sm:$0xf]
    %v73 = vld [vmem:[#allocation4 + $0xc] sm:$0xf]
    %v78 = vunpack.c.l.b16 %v70
    %v79 = vunpack.c.l.b16 %v71
    %v80 = vunpack.c.l.b16 %v72
    %v81 = vunpack.c.l.b16 %v73
    %v82 = vpack.c.b16 %v79, %v78
    %v83 = vpack.c.b16 %v81, %v80
    %vm86 = vcmask 261120
    %v88 = vsel %vm86, %v65, 0
    %90 = vmatprep.subr.bf16.mxu0 0
    %91 = vmatpush1.bf16.msra.mxu0 0
    %92 = vmatprep.subr.bf16.mxu0 0
    %93 = vmatpush1.bf16.msra.mxu0 0
    %94 = vmatprep.subr.bf16.mxu0 0
    %95 = vmatpush1.bf16.msra.mxu0 0
    %96 = vmatprep.subr.bf16.mxu0 0
    %97 = vmatpush1.bf16.msra.mxu0 0
    %98 = vmatprep.subr.bf16.mxu0 0
    %99 = vmatpush1.bf16.msra.mxu0 0
    %100 = vmatprep.subr.bf16.mxu0 0
    %101 = vmatpush1.bf16.msra.mxu0 0
    %102 = vmatprep.subr.bf16.mxu0 0
    %103 = vmatpush1.bf16.msra.mxu0 %v83
    %104 = vmatprep.subr.bf16.mxu0 0
    %105 = vmatpush1.bf16.msra.mxu0 %v82
    %106 = vmatprep.subr.bf16.mxu0 0
    %107 = vmatpush2.bf16.msra.mxu0 0
    %108 = vmatprep.subr.bf16.mxu0 0
    %109 = vmatpush2.bf16.msra.mxu0 0
    %110 = vmatprep.subr.bf16.mxu0 0
    %111 = vmatpush2.bf16.msra.mxu0 0
    %112 = vmatprep.subr.bf16.mxu0 0
    %113 = vmatpush2.bf16.msra.mxu0 0
    %114 = vmatprep.subr.bf16.mxu0 0
    %115 = vmatpush2.bf16.msra.mxu0 0
    %116 = vmatprep.subr.bf16.mxu0 0
    %117 = vmatpush2.bf16.msra.mxu0 0
    %118 = vmatprep.subr.bf16.mxu0 0
    %119 = vmatpush2.bf16.msra.mxu0 0
    %120 = vmatprep.subr.bf16.mxu0 0
    %121 = vmatpush2.bf16.msra.mxu0 0
    %122 = vmatprep.mubr.bf16.mxu0 0
    %123 = vmatmul.mubr.bf16.gmra.mxu0 %v88
    %v124 = vpop.f32.mrf.mxu0
    %v125 = vadd.f32 0.0, %v124
    %v126 = vpop.f32.mrf.mxu0
    %v127 = vpop.f32.mrf.mxu0
    %v128 = vadd.f32 0.0, %v127
    %v129 = vpop.f32.mrf.mxu0
    %130 = vdwg.mxu0
    %v135 = vunpack.c.l.b16 %v66
    %v136 = vunpack.c.l.b16 %v67
    %v137 = vunpack.c.l.b16 %v68
    %v138 = vunpack.c.l.b16 %v69
    %v139 = vpack.c.b16 %v136, %v135
    %v140 = vpack.c.b16 %v138, %v137
    %143 = vmatprep.subr.bf16.mxu0 0
    %144 = vmatpush1.bf16.msra.mxu0 0
    %145 = vmatprep.subr.bf16.mxu0 0
    %146 = vmatpush1.bf16.msra.mxu0 0
    %147 = vmatprep.subr.bf16.mxu0 0
    %148 = vmatpush1.bf16.msra.mxu0 0
    %149 = vmatprep.subr.bf16.mxu0 0
    %150 = vmatpush1.bf16.msra.mxu0 0
    %151 = vmatprep.subr.bf16.mxu0 0
    %152 = vmatpush1.bf16.msra.mxu0 0
    %153 = vmatprep.subr.bf16.mxu0 0
    %154 = vmatpush1.bf16.msra.mxu0 0
    %155 = vmatprep.subr.bf16.mxu0 0
    %156 = vmatpush1.bf16.msra.mxu0 %v140
    %157 = vmatprep.subr.bf16.mxu0 0
    %158 = vmatpush1.bf16.msra.mxu0 %v139
    %159 = vmatprep.subr.bf16.mxu0 0
    %160 = vmatpush2.bf16.msra.mxu0 0
    %161 = vmatprep.subr.bf16.mxu0 0
    %162 = vmatpush2.bf16.msra.mxu0 0
    %163 = vmatprep.subr.bf16.mxu0 0
    %164 = vmatpush2.bf16.msra.mxu0 0
    %165 = vmatprep.subr.bf16.mxu0 0
    %166 = vmatpush2.bf16.msra.mxu0 0
    %167 = vmatprep.subr.bf16.mxu0 0
    %168 = vmatpush2.bf16.msra.mxu0 0
    %169 = vmatprep.subr.bf16.mxu0 0
    %170 = vmatpush2.bf16.msra.mxu0 0
    %171 = vmatprep.subr.bf16.mxu0 0
    %172 = vmatpush2.bf16.msra.mxu0 0
    %173 = vmatprep.subr.bf16.mxu0 0
    %174 = vmatpush2.bf16.msra.mxu0 0
    %175 = vmatprep.mubr.bf16.mxu0 0
    %176 = vmatmul.mubr.bf16.gmra.mxu0 %v88
    %v177 = vpop.f32.mrf.mxu0
    %v178 = vadd.f32 %v125, %v177
    %v179 = vpop.f32.mrf.mxu0
    %v180 = vpop.f32.mrf.mxu0
    %v181 = vadd.f32 %v128, %v180
    %v182 = vpop.f32.mrf.mxu0
    %183 = vdwg.mxu0
    %v184 = vld [vmem:[#allocation7] sm:$0xff]
    %v185 = vld [vmem:[#allocation7 + $0x8] sm:$0xff]
    %v186 = vadd.f32 %v178, %v184
    %v187 = vadd.f32 %v181, %v185
    %188 = vst.msk [vmem:[#allocation9] sm:$0xff] %vm86, %v186
    %189 = vst.msk [vmem:[#allocation9 + $0x8] sm:$0xff] %vm86, %v187
    // Predicated region
    $region26: #{tpu_custom_call.1} parent=1 // pred_check
      _
    $region27: #{tpu_custom_call.1} parent=1 // pred_check_branch
      %191 = sbr.rel (0) target = $region29
    $region28: #{tpu_custom_call.1} parent=1 // pred_region
      %s193 = ssub.s32 256, 256
      %194 = vsyncadd [#allocation6], %s193
      %s195 = sshll.u32 [#allocation9], 4
      %s196 = int_to_ptr.vmem [resolvable:$true] %s195
      %201 = dma.vmem_to_hbm [thread:$0]  %s196, 256, %s5, [#allocation6], 128, 128, 8
    $region29: #{tpu_custom_call.1} parent=1 // pred_fallthru
      _
    // Predicated region
    $region30: #{tpu_custom_call.1} parent=1 // pred_check
      _
    $region31: #{tpu_custom_call.1} parent=1 // pred_check_branch
      %203 = sbr.rel (0) target = $region33
    $region32: #{tpu_custom_call.1} parent=1 // pred_region
      %204 = dma.done [#allocation6], 256
    $region33: #{tpu_custom_call.1} parent=1 // pred_fallthru
      _
    %205 = vsyncpa [#allocation5], 1
    %206 = vsyncpa [#allocation8], 1
    %207 = vsyncpa [#allocation6], 1

</llo_original>
